<compile_context>
chip_gen: v7x
topology: tpu7x:2x2x1
jax: 0.10.0
libtpu: 0.0.40
codegen_flags: <defaults>
</compile_context>

<pallas_src>
import functools

import numpy as np
import jax
import jax.numpy as jnp
from jax.experimental import pallas as pl
from jax.experimental.pallas import tpu as pltpu

ESP = 1e-6
NEG_BIG = -1e30  # finite "minus infinity": max/rescale/exp math never produces NaN


def _round_up(x: int, m: int) -> int:
    return (x + m - 1) // m * m


def detcon_kernel(q_ref, row_n_ref, row_a_ref, msum_ref,   # (TB,D) bf16, 3x (TB,1) f32
                  kT_ref, kmeta_ref,                        # (D,Bc) bf16, (4,Bc) f32  resident
                  qT_ref, qmeta_ref,                        # (D,TQ) bf16, (4,TQ) f32  streamed
                  out_ref,                                  # (TB,1) f32 per-row loss
                  m_all_ref, m_n_ref, l_na_ref, l_an_ref):  # (TB,1) f32 scratch
    j = pl.program_id(1)
    nj = pl.num_programs(1)
    qv = q_ref[...]                                         # (TB, D) bf16, one load/step

    def update(keys_ref, meta_ref):
        # keys_ref: (D, C) bf16 pre-transposed keys.
        # meta_ref: (4, C) f32 rows = [bias_n, bias_valid, col_n, col_a];
        # padding columns carry bias = NEG_BIG and col_n = col_a = 0.
        bias_n = meta_ref[0:1, :]
        bias_v = meta_ref[1:2, :]
        col_n = meta_ref[2:3, :]
        col_a = meta_ref[3:4, :]

        s = jax.lax.dot_general(qv, keys_ref[...],
                                (((1,), (0,)), ((), ())),
                                preferred_element_type=jnp.float32)   # (TB, C)

        m_n_new = jnp.maximum(m_n_ref[...],
                              jnp.max(s + bias_n, axis=1, keepdims=True))
        m_all_new = jnp.maximum(m_all_ref[...],
                                jnp.max(s + bias_v, axis=1, keepdims=True))

        # Per-column base: m_n on normal columns, m_all on anomalous ones.
        # Clamping the exponent at 0 is a no-op on valid columns (their
        # exponent is <= 0 by construction) and makes padding overflow-proof;
        # padding contributions are then exactly zeroed by the 0/1 masks.
        d = m_n_new - m_all_new                                        # (TB,1) <= 0
        e = jnp.exp(jnp.minimum(s - m_all_new - col_n * d, 0.0))

        l_an_ref[...] = (l_an_ref[...] * jnp.exp(m_n_ref[...] - m_n_new)
                         + jnp.sum(e * col_n, axis=1, keepdims=True))
        l_na_ref[...] = (l_na_ref[...] * jnp.exp(m_all_ref[...] - m_all_new)
                         + jnp.sum(e * col_a, axis=1, keepdims=True))
        m_n_ref[...] = m_n_new
        m_all_ref[...] = m_all_new

    @pl.when(j == 0)
    def _init_and_fold_in_batch_keys():
        m_all_ref[...] = jnp.full_like(m_all_ref, NEG_BIG)
        m_n_ref[...] = jnp.full_like(m_n_ref, NEG_BIG)
        l_na_ref[...] = jnp.zeros_like(l_na_ref)
        l_an_ref[...] = jnp.zeros_like(l_an_ref)
        update(kT_ref, kmeta_ref)            # in-batch keys folded once per row block

    update(qT_ref, qmeta_ref)                # streamed queue tile for this grid step

    @pl.when(j == nj - 1)
    def _finalize():
        # normal rows:    -( mean_n(s) - m_all - log(sum_a exp(s - m_all) + ESP) )
        # anomalous rows:  log(sum_n exp(s - m_n) + ESP) / n_rows_a
        loss1 = msum_ref[...] - m_all_ref[...] - jnp.log(l_na_ref[...] + ESP)
        loss2 = jnp.log(l_an_ref[...] + ESP) * row_a_ref[...]   # row_a pre-scaled by 1/n_rows_a
        out_ref[...] = loss2 - row_n_ref[...] * loss1


def _col_meta(lab_n, c_pad: int):
    """(4, c_pad) f32 rows [bias_n, bias_valid, col_n, col_a]; padding -> NEG/0."""
    c = lab_n.shape[0]
    col_n = jnp.pad(lab_n, (0, c_pad - c))
    col_a = jnp.pad(1.0 - lab_n, (0, c_pad - c))
    bias_n = NEG_BIG * (1.0 - col_n)
    bias_v = NEG_BIG * (1.0 - (col_n + col_a))
    return jnp.stack([bias_n, bias_v, col_n, col_a], axis=0).astype(jnp.float32)


def detcon_loss(q, k, y, queue_feats, queue_labels, T: float = 0.07,
                *, tb: int = 256, tq: int = 2048):
    """Pallas DetConLoss. q,k: (B,D); y: (B,) int; queue_feats: (Q,D); queue_labels: (Q,)."""
    B, D = q.shape
    Q = int(queue_feats.shape[0])
    f32 = jnp.float32
    inv_temp = jnp.asarray(1.0 / float(T), f32)

    y_n = (y == 0).astype(f32)                 # (B,)  1 on normal rows/keys
    ql_n = (queue_labels == 0).astype(f32)     # (Q,)  1 on normal queue entries

    # bf16 operands (MXU-native; accumulation stays f32 in-kernel).
    q_b = (q.astype(f32) * inv_temp).astype(jnp.bfloat16)   # 1/T folded into q once
    k_b = k.astype(jnp.bfloat16)
    qf_b = queue_feats.astype(jnp.bfloat16)

    # ---- query-row blocks ("parallel" axis; megacore splits across TCs) ----
    tb = max(16, _round_up(tb, 16))
    TB = min(tb, _round_up(B, 16))
    B_pad = _round_up(B, TB)
    pad_b = B_pad - B
    q_p = jnp.pad(q_b, ((0, pad_b), (0, 0)))

    # ---- resident in-batch keys: (D, Bc) bf16, lane-aligned columns --------
    Bc = _round_up(B, 128)
    kT = jnp.pad(jnp.transpose(k_b), ((0, 0), (0, Bc - B)))
    kmeta = _col_meta(y_n, Bc)

    # ---- streamed queue: (D, TQ) bf16 tiles, pre-transposed ----------------
    tq = max(128, _round_up(tq, 128))
    TQ = min(tq, _round_up(max(Q, 1), 128))
    Q_pad = max(_round_up(Q, TQ), TQ)
    qfT = jnp.pad(jnp.transpose(qf_b), ((0, 0), (0, Q_pad - Q)))
    qmeta = _col_meta(ql_n, Q_pad)

    # ---- per-row metadata (wrapper-side, O(B*D); torch NaNs on empty classes
    #      are guarded with max(.,1)) -----------------------------------------
    n_cols_n = jnp.sum(y_n) + jnp.sum(ql_n)
    n_rows_a = jnp.sum(1.0 - y_n)
    inv_ncn = 1.0 / jnp.maximum(n_cols_n, 1.0)
    inv_nra = 1.0 / jnp.maximum(n_rows_a, 1.0)
    # mean over normal columns of s  ==  (q/T) . (sum of normal keys) / n_cols_n
    key_sum_n = ((k_b.astype(f32) * y_n[:, None]).sum(axis=0)
                 + (qf_b.astype(f32) * ql_n[:, None]).sum(axis=0))       # (D,)
    mean_s = (q_b.astype(f32) @ key_sum_n) * inv_ncn                     # (B,)

    row_n = jnp.pad(y_n, (0, pad_b)).reshape(-1, 1)
    row_a = jnp.pad((1.0 - y_n) * inv_nra, (0, pad_b)).reshape(-1, 1)
    msum = jnp.pad(mean_s, (0, pad_b)).reshape(-1, 1).astype(f32)

    n_row_blocks = B_pad // TB
    n_q_tiles = Q_pad // TQ

    # ---- VMEM budget: double-buffered operands + live (TB, C) temporaries ---
    cmax = max(TQ, Bc)
    vmem_est = (2 * TB * D * 2 + 2 * D * TQ * 2 + D * Bc * 2             # bf16 tiles
                + 2 * 8 * TQ * 4 + 8 * Bc * 4                             # meta rows
                + 6 * TB * cmax * 4 + 64 * TB * 4)                        # f32 temporaries
    try:
        phys = int(pltpu.get_tpu_info().vmem_capacity_bytes)
    except Exception:
        phys = 128 * 1024 * 1024
    vmem_limit = int(min(max(2 * vmem_est, 32 * 1024 * 1024), (phys * 3) // 4))

    out = pl.pallas_call(
        detcon_kernel,
        out_shape=jax.ShapeDtypeStruct((B_pad, 1), jnp.float32),
        grid=(n_row_blocks, n_q_tiles),
        in_specs=[
            pl.BlockSpec((TB, D), lambda i, j: (i, 0)),       # q rows (bf16, already /T)
            pl.BlockSpec((TB, 1), lambda i, j: (i, 0)),       # row_n
            pl.BlockSpec((TB, 1), lambda i, j: (i, 0)),       # row_a / n_rows_a
            pl.BlockSpec((TB, 1), lambda i, j: (i, 0)),       # mean_n(s)
            pl.BlockSpec((D, Bc), lambda i, j: (0, 0)),       # kT (resident)
            pl.BlockSpec((4, Bc), lambda i, j: (0, 0)),       # k column meta (resident)
            pl.BlockSpec((D, TQ), lambda i, j: (0, j)),       # queue tile (streamed)
            pl.BlockSpec((4, TQ), lambda i, j: (0, j)),       # queue column meta (streamed)
        ],
        out_specs=pl.BlockSpec((TB, 1), lambda i, j: (i, 0)),
        scratch_shapes=[pltpu.VMEM((TB, 1), jnp.float32)] * 4,
        compiler_params=pltpu.CompilerParams(
            dimension_semantics=("parallel", "arbitrary"),
            vmem_limit_bytes=vmem_limit),
    )(q_p, row_n, row_a, msum, kT, kmeta, qfT, qmeta)

    return jnp.sum(out)


def _reference_numpy(q, k, y, qf, ql, T=0.07):
    """Direct transcription of the PyTorch forward (numpy, dynamic shapes)."""
    q, k, qf = np.asarray(q, np.float32), np.asarray(k, np.float32), np.asarray(qf, np.float32)
    y, ql = np.asarray(y), np.asarray(ql)
    mn = y == 0
    q_n, q_a = q[mn], q[~mn]
    k_n, k_a = k[mn], k[~mn]
    mq = ql == 0
    h_n, h_a = qf[mq], qf[~mq]
    sim_n_n = q_n @ np.concatenate([k_n, h_n], 0).T / T
    sim_n_a = q_n @ np.concatenate([k_a, h_a], 0).T / T
    sim_a_n = q_a @ np.concatenate([k_n, h_n], 0).T / T
    m1 = np.max(np.concatenate([sim_n_n, sim_n_a], 1), axis=1, keepdims=True)
    m2 = np.max(sim_a_n, axis=1, keepdims=True)
    sim_n_n, sim_n_a, sim_a_n = sim_n_n - m1, sim_n_a - m1, sim_a_n - m2
    l1 = sim_n_n - np.log(np.sum(np.exp(sim_n_a), 1, keepdims=True) + ESP)
    l1 = -np.sum(np.mean(l1, 1, keepdims=True))
    l2 = np.mean(np.log(np.sum(np.exp(sim_a_n), 1, keepdims=True) + ESP))
    return np.float32(l1 + l2)


if __name__ == "__main__":
    B, D, Q = 8, 32, 24
    T = 0.07
    key = jax.random.PRNGKey(0)
    kq_, kk_, kqf_, ky_, kql_ = jax.random.split(key, 5)

    def _unit(x):
        return x / jnp.linalg.norm(x, axis=-1, keepdims=True)

    q = _unit(jax.random.normal(kq_, (B, D), dtype=jnp.float32))
    k = _unit(jax.random.normal(kk_, (B, D), dtype=jnp.float32))
    queue_feats = _unit(jax.random.normal(kqf_, (Q, D), dtype=jnp.float32))

    y = jax.random.bernoulli(ky_, 0.4, (B,)).astype(jnp.int32)
    y = y.at[0].set(0).at[1].set(1)                 # guarantee both classes present
    queue_labels = jax.random.bernoulli(kql_, 0.4, (Q,)).astype(jnp.int32)
    queue_labels = queue_labels.at[0].set(0).at[1].set(1)

    loss = jax.block_until_ready(detcon_loss(q, k, y, queue_feats, queue_labels, T=T))

    # Tight check: reference evaluated on the same bf16-rounded operands the
    # kernel consumes (remaining difference is f32 accumulation order only).
    q_r = np.asarray((q / T).astype(jnp.bfloat16).astype(jnp.float32))
    k_r = np.asarray(k.astype(jnp.bfloat16).astype(jnp.float32))
    qf_r = np.asarray(queue_feats.astype(jnp.bfloat16).astype(jnp.float32))
    ref_bf16 = _reference_numpy(q_r, k_r, y, qf_r, queue_labels, T=1.0)
    assert np.allclose(np.asarray(loss), ref_bf16, rtol=2e-3, atol=2e-3), (loss, ref_bf16)

    # Loose sanity check vs. the pure-f32 reference (difference == bf16 rounding
    # of the inputs, intentionally introduced for MXU/HBM performance).
    ref_f32 = _reference_numpy(q, k, y, queue_feats, queue_labels, T=T)
    assert np.allclose(np.asarray(loss), ref_f32, rtol=1e-1, atol=1.0), (loss, ref_f32)

    print("KERNEL_OK")
</pallas_src>

<mosaic_0001>
module attributes {stable_mosaic.version = 11 : i64} {
  func.func @detcon_kernel(%arg0: i32, %arg1: i32, %arg2: memref<16x32xbf16, #tpu.memory_space<vmem>>, %arg3: memref<16x1xf32, #tpu.memory_space<vmem>>, %arg4: memref<16x1xf32, #tpu.memory_space<vmem>>, %arg5: memref<16x1xf32, #tpu.memory_space<vmem>>, %arg6: memref<32x128xbf16, #tpu.memory_space<vmem>>, %arg7: memref<4x128xf32, #tpu.memory_space<vmem>>, %arg8: memref<32x128xbf16, #tpu.memory_space<vmem>>, %arg9: memref<4x128xf32, #tpu.memory_space<vmem>>, %arg10: memref<16x1xf32, #tpu.memory_space<vmem>>, %arg11: memref<16x1xf32, #tpu.memory_space<vmem>>, %arg12: memref<16x1xf32, #tpu.memory_space<vmem>>, %arg13: memref<16x1xf32, #tpu.memory_space<vmem>>, %arg14: memref<16x1xf32, #tpu.memory_space<vmem>>) attributes {dimension_semantics = [#tpu.dimension_semantics<parallel>, #tpu.dimension_semantics<arbitrary>], iteration_bounds = array<i64: 1, 1>, scalar_prefetch = 0 : i64, scratch_operands = 4 : i64, tpu.core_type = #tpu.core_type<tc>, window_params = [{transform_indices = @transform_0, window_bounds = array<i64: 16, 32>}, {transform_indices = @transform_1, window_bounds = array<i64: 16, 1>}, {transform_indices = @transform_2, window_bounds = array<i64: 16, 1>}, {transform_indices = @transform_3, window_bounds = array<i64: 16, 1>}, {pipeline_mode = #tpu.pipeline_mode<synchronous>, transform_indices = @transform_4, window_bounds = array<i64: 32, 128>}, {pipeline_mode = #tpu.pipeline_mode<synchronous>, transform_indices = @transform_5, window_bounds = array<i64: 4, 128>}, {transform_indices = @transform_6, window_bounds = array<i64: 32, 128>}, {transform_indices = @transform_7, window_bounds = array<i64: 4, 128>}, {transform_indices = @transform_8, window_bounds = array<i64: 16, 1>}]} {
    %c0 = arith.constant 0 : index
    %c0_0 = arith.constant 0 : index
    %0 = vector.load %arg2[%c0, %c0_0] : memref<16x32xbf16, #tpu.memory_space<vmem>>, vector<16x32xbf16>
    %c0_i32 = arith.constant 0 : i32
    %1 = arith.cmpi eq, %arg1, %c0_i32 : i32
    %2 = arith.extui %1 : i1 to i32
    %c0_i32_1 = arith.constant 0 : i32
    %3 = arith.cmpi ne, %2, %c0_i32_1 : i32
    scf.if %3 {
      %cst_36 = arith.constant -1.000000e+30 : f32
      %59 = vector.broadcast %cst_36 : f32 to vector<16x1xf32>
      %c0_37 = arith.constant 0 : index
      %c0_38 = arith.constant 0 : index
      %60 = vector.load %arg11[%c0_37, %c0_38] : memref<16x1xf32, #tpu.memory_space<vmem>>, vector<16x1xf32>
      tpu.vector_store %arg11[%c0_37, %c0_38], %59 {strides = array<i32>} : memref<16x1xf32, #tpu.memory_space<vmem>>, vector<16x1xf32>,
      %cst_39 = arith.constant -1.000000e+30 : f32
      %61 = vector.broadcast %cst_39 : f32 to vector<16x1xf32>
      %c0_40 = arith.constant 0 : index
      %c0_41 = arith.constant 0 : index
      %62 = vector.load %arg12[%c0_40, %c0_41] : memref<16x1xf32, #tpu.memory_space<vmem>>, vector<16x1xf32>
      tpu.vector_store %arg12[%c0_40, %c0_41], %61 {strides = array<i32>} : memref<16x1xf32, #tpu.memory_space<vmem>>, vector<16x1xf32>,
      %cst_42 = arith.constant 0.000000e+00 : f32
      %63 = vector.broadcast %cst_42 : f32 to vector<16x1xf32>
      %c0_43 = arith.constant 0 : index
      %c0_44 = arith.constant 0 : index
      %64 = vector.load %arg13[%c0_43, %c0_44] : memref<16x1xf32, #tpu.memory_space<vmem>>, vector<16x1xf32>
      tpu.vector_store %arg13[%c0_43, %c0_44], %63 {strides = array<i32>} : memref<16x1xf32, #tpu.memory_space<vmem>>, vector<16x1xf32>,
      %cst_45 = arith.constant 0.000000e+00 : f32
      %65 = vector.broadcast %cst_45 : f32 to vector<16x1xf32>
      %c0_46 = arith.constant 0 : index
      %c0_47 = arith.constant 0 : index
      %66 = vector.load %arg14[%c0_46, %c0_47] : memref<16x1xf32, #tpu.memory_space<vmem>>, vector<16x1xf32>
      tpu.vector_store %arg14[%c0_46, %c0_47], %65 {strides = array<i32>} : memref<16x1xf32, #tpu.memory_space<vmem>>, vector<16x1xf32>,
      %c0_48 = arith.constant 0 : index
      %c0_49 = arith.constant 0 : index
      %67 = vector.load %arg7[%c0_48, %c0_49] : memref<4x128xf32, #tpu.memory_space<vmem>>, vector<1x128xf32>
      %c1_50 = arith.constant 1 : index
      %c0_51 = arith.constant 0 : index
      %68 = vector.load %arg7[%c1_50, %c0_51] : memref<4x128xf32, #tpu.memory_space<vmem>>, vector<1x128xf32>
      %c2_52 = arith.constant 2 : index
      %c0_53 = arith.constant 0 : index
      %69 = vector.load %arg7[%c2_52, %c0_53] : memref<4x128xf32, #tpu.memory_space<vmem>>, vector<1x128xf32>
      %c3_54 = arith.constant 3 : index
      %c0_55 = arith.constant 0 : index
      %70 = vector.load %arg7[%c3_54, %c0_55] : memref<4x128xf32, #tpu.memory_space<vmem>>, vector<1x128xf32>
      %c0_56 = arith.constant 0 : index
      %c0_57 = arith.constant 0 : index
      %71 = vector.load %arg6[%c0_56, %c0_57] : memref<32x128xbf16, #tpu.memory_space<vmem>>, vector<32x128xbf16>
      %cst_58 = arith.constant dense<0.000000e+00> : vector<16x128xf32>
      %72 = tpu.matmul %0, %71, %cst_58 {dimension_numbers = #tpu.dot_dimension_numbers<[1], [0], [0], [1], [0, 0, 1, 1], [], []>} : vector<16x32xbf16>, vector<32x128xbf16>, vector<16x128xf32> -> vector<16x128xf32>
      %c0_59 = arith.constant 0 : index
      %c0_60 = arith.constant 0 : index
      %73 = vector.load %arg12[%c0_59, %c0_60] : memref<16x1xf32, #tpu.memory_space<vmem>>, vector<16x1xf32>
      %74 = vector.broadcast %67 : vector<1x128xf32> to vector<16x128xf32>
      %75 = arith.addf %72, %74 : vector<16x128xf32>
      %cst_61 = arith.constant dense<0xFF800000> : vector<16xf32>
      %76 = vector.multi_reduction <maximumf>, %75, %cst_61 [1] : vector<16x128xf32> to vector<16xf32>
      %77 = vector.shape_cast %76 : vector<16xf32> to vector<16x1xf32>
      %78 = arith.maximumf %73, %77 : vector<16x1xf32>
      %c0_62 = arith.constant 0 : index
      %c0_63 = arith.constant 0 : index
      %79 = vector.load %arg11[%c0_62, %c0_63] : memref<16x1xf32, #tpu.memory_space<vmem>>, vector<16x1xf32>
      %80 = vector.broadcast %68 : vector<1x128xf32> to vector<16x128xf32>
      %81 = arith.addf %72, %80 : vector<16x128xf32>
      %cst_64 = arith.constant dense<0xFF800000> : vector<16xf32>
      %82 = vector.multi_reduction <maximumf>, %81, %cst_64 [1] : vector<16x128xf32> to vector<16xf32>
      %83 = vector.shape_cast %82 : vector<16xf32> to vector<16x1xf32>
      %84 = arith.maximumf %79, %83 : vector<16x1xf32>
      %85 = arith.subf %78, %84 : vector<16x1xf32>
      %86 = vector.broadcast %84 : vector<16x1xf32> to vector<16x128xf32>
      %87 = arith.subf %72, %86 : vector<16x128xf32>
      %88 = vector.broadcast %69 : vector<1x128xf32> to vector<16x128xf32>
      %89 = vector.broadcast %85 : vector<16x1xf32> to vector<16x128xf32>
      %90 = arith.mulf %88, %89 : vector<16x128xf32>
      %91 = arith.subf %87, %90 : vector<16x128xf32>
      %cst_65 = arith.constant 0.000000e+00 : f32
      %92 = vector.broadcast %cst_65 : f32 to vector<16x128xf32>
      %93 = arith.minimumf %91, %92 : vector<16x128xf32>
      %94 = math.exp %93 : vector<16x128xf32>
      %c0_66 = arith.constant 0 : index
      %c0_67 = arith.constant 0 : index
      %95 = vector.load %arg14[%c0_66, %c0_67] : memref<16x1xf32, #tpu.memory_space<vmem>>, vector<16x1xf32>
      %c0_68 = arith.constant 0 : index
      %c0_69 = arith.constant 0 : index
      %96 = vector.load %arg12[%c0_68, %c0_69] : memref<16x1xf32, #tpu.memory_space<vmem>>, vector<16x1xf32>
      %97 = arith.subf %96, %78 : vector<16x1xf32>
      %98 = math.exp %97 : vector<16x1xf32>
      %99 = arith.mulf %95, %98 : vector<16x1xf32>
      %100 = vector.broadcast %69 : vector<1x128xf32> to vector<16x128xf32>
      %101 = arith.mulf %94, %100 : vector<16x128xf32>
      %cst_70 = arith.constant dense<0.000000e+00> : vector<16xf32>
      %102 = vector.multi_reduction <add>, %101, %cst_70 [1] : vector<16x128xf32> to vector<16xf32>
      %103 = vector.shape_cast %102 : vector<16xf32> to vector<16x1xf32>
      %104 = arith.addf %99, %103 : vector<16x1xf32>
      %c0_71 = arith.constant 0 : index
      %c0_72 = arith.constant 0 : index
      %105 = vector.load %arg14[%c0_71, %c0_72] : memref<16x1xf32, #tpu.memory_space<vmem>>, vector<16x1xf32>
      tpu.vector_store %arg14[%c0_71, %c0_72], %104 {strides = array<i32>} : memref<16x1xf32, #tpu.memory_space<vmem>>, vector<16x1xf32>,
      %c0_73 = arith.constant 0 : index
      %c0_74 = arith.constant 0 : index
      %106 = vector.load %arg13[%c0_73, %c0_74] : memref<16x1xf32, #tpu.memory_space<vmem>>, vector<16x1xf32>
      %c0_75 = arith.constant 0 : index
      %c0_76 = arith.constant 0 : index
      %107 = vector.load %arg11[%c0_75, %c0_76] : memref<16x1xf32, #tpu.memory_space<vmem>>, vector<16x1xf32>
      %108 = arith.subf %107, %84 : vector<16x1xf32>
      %109 = math.exp %108 : vector<16x1xf32>
      %110 = arith.mulf %106, %109 : vector<16x1xf32>
      %111 = vector.broadcast %70 : vector<1x128xf32> to vector<16x128xf32>
      %112 = arith.mulf %94, %111 : vector<16x128xf32>
      %cst_77 = arith.constant dense<0.000000e+00> : vector<16xf32>
      %113 = vector.multi_reduction <add>, %112, %cst_77 [1] : vector<16x128xf32> to vector<16xf32>
      %114 = vector.shape_cast %113 : vector<16xf32> to vector<16x1xf32>
      %115 = arith.addf %110, %114 : vector<16x1xf32>
      %c0_78 = arith.constant 0 : index
      %c0_79 = arith.constant 0 : index
      %116 = vector.load %arg13[%c0_78, %c0_79] : memref<16x1xf32, #tpu.memory_space<vmem>>, vector<16x1xf32>
      tpu.vector_store %arg13[%c0_78, %c0_79], %115 {strides = array<i32>} : memref<16x1xf32, #tpu.memory_space<vmem>>, vector<16x1xf32>,
      %c0_80 = arith.constant 0 : index
      %c0_81 = arith.constant 0 : index
      %117 = vector.load %arg12[%c0_80, %c0_81] : memref<16x1xf32, #tpu.memory_space<vmem>>, vector<16x1xf32>
      tpu.vector_store %arg12[%c0_80, %c0_81], %78 {strides = array<i32>} : memref<16x1xf32, #tpu.memory_space<vmem>>, vector<16x1xf32>,
      %c0_82 = arith.constant 0 : index
      %c0_83 = arith.constant 0 : index
      %118 = vector.load %arg11[%c0_82, %c0_83] : memref<16x1xf32, #tpu.memory_space<vmem>>, vector<16x1xf32>
      tpu.vector_store %arg11[%c0_82, %c0_83], %84 {strides = array<i32>} : memref<16x1xf32, #tpu.memory_space<vmem>>, vector<16x1xf32>,
    } else {
    }
    %c0_2 = arith.constant 0 : index
    %c0_3 = arith.constant 0 : index
    %4 = vector.load %arg9[%c0_2, %c0_3] : memref<4x128xf32, #tpu.memory_space<vmem>>, vector<1x128xf32>
    %c1 = arith.constant 1 : index
    %c0_4 = arith.constant 0 : index
    %5 = vector.load %arg9[%c1, %c0_4] : memref<4x128xf32, #tpu.memory_space<vmem>>, vector<1x128xf32>
    %c2 = arith.constant 2 : index
    %c0_5 = arith.constant 0 : index
    %6 = vector.load %arg9[%c2, %c0_5] : memref<4x128xf32, #tpu.memory_space<vmem>>, vector<1x128xf32>
    %c3 = arith.constant 3 : index
    %c0_6 = arith.constant 0 : index
    %7 = vector.load %arg9[%c3, %c0_6] : memref<4x128xf32, #tpu.memory_space<vmem>>, vector<1x128xf32>
    %c0_7 = arith.constant 0 : index
    %c0_8 = arith.constant 0 : index
    %8 = vector.load %arg8[%c0_7, %c0_8] : memref<32x128xbf16, #tpu.memory_space<vmem>>, vector<32x128xbf16>
    %cst = arith.constant dense<0.000000e+00> : vector<16x128xf32>
    %9 = tpu.matmul %0, %8, %cst {dimension_numbers = #tpu.dot_dimension_numbers<[1], [0], [0], [1], [0, 0, 1, 1], [], []>} : vector<16x32xbf16>, vector<32x128xbf16>, vector<16x128xf32> -> vector<16x128xf32>
    %c0_9 = arith.constant 0 : index
    %c0_10 = arith.constant 0 : index
    %10 = vector.load %arg12[%c0_9, %c0_10] : memref<16x1xf32, #tpu.memory_space<vmem>>, vector<16x1xf32>
    %11 = vector.broadcast %4 : vector<1x128xf32> to vector<16x128xf32>
    %12 = arith.addf %9, %11 : vector<16x128xf32>
    %cst_11 = arith.constant dense<0xFF800000> : vector<16xf32>
    %13 = vector.multi_reduction <maximumf>, %12, %cst_11 [1] : vector<16x128xf32> to vector<16xf32>
    %14 = vector.shape_cast %13 : vector<16xf32> to vector<16x1xf32>
    %15 = arith.maximumf %10, %14 : vector<16x1xf32>
    %c0_12 = arith.constant 0 : index
    %c0_13 = arith.constant 0 : index
    %16 = vector.load %arg11[%c0_12, %c0_13] : memref<16x1xf32, #tpu.memory_space<vmem>>, vector<16x1xf32>
    %17 = vector.broadcast %5 : vector<1x128xf32> to vector<16x128xf32>
    %18 = arith.addf %9, %17 : vector<16x128xf32>
    %cst_14 = arith.constant dense<0xFF800000> : vector<16xf32>
    %19 = vector.multi_reduction <maximumf>, %18, %cst_14 [1] : vector<16x128xf32> to vector<16xf32>
    %20 = vector.shape_cast %19 : vector<16xf32> to vector<16x1xf32>
    %21 = arith.maximumf %16, %20 : vector<16x1xf32>
    %22 = arith.subf %15, %21 : vector<16x1xf32>
    %23 = vector.broadcast %21 : vector<16x1xf32> to vector<16x128xf32>
    %24 = arith.subf %9, %23 : vector<16x128xf32>
    %25 = vector.broadcast %6 : vector<1x128xf32> to vector<16x128xf32>
    %26 = vector.broadcast %22 : vector<16x1xf32> to vector<16x128xf32>
    %27 = arith.mulf %25, %26 : vector<16x128xf32>
    %28 = arith.subf %24, %27 : vector<16x128xf32>
    %cst_15 = arith.constant 0.000000e+00 : f32
    %29 = vector.broadcast %cst_15 : f32 to vector<16x128xf32>
    %30 = arith.minimumf %28, %29 : vector<16x128xf32>
    %31 = math.exp %30 : vector<16x128xf32>
    %c0_16 = arith.constant 0 : index
    %c0_17 = arith.constant 0 : index
    %32 = vector.load %arg14[%c0_16, %c0_17] : memref<16x1xf32, #tpu.memory_space<vmem>>, vector<16x1xf32>
    %c0_18 = arith.constant 0 : index
    %c0_19 = arith.constant 0 : index
    %33 = vector.load %arg12[%c0_18, %c0_19] : memref<16x1xf32, #tpu.memory_space<vmem>>, vector<16x1xf32>
    %34 = arith.subf %33, %15 : vector<16x1xf32>
    %35 = math.exp %34 : vector<16x1xf32>
    %36 = arith.mulf %32, %35 : vector<16x1xf32>
    %37 = vector.broadcast %6 : vector<1x128xf32> to vector<16x128xf32>
    %38 = arith.mulf %31, %37 : vector<16x128xf32>
    %cst_20 = arith.constant dense<0.000000e+00> : vector<16xf32>
    %39 = vector.multi_reduction <add>, %38, %cst_20 [1] : vector<16x128xf32> to vector<16xf32>
    %40 = vector.shape_cast %39 : vector<16xf32> to vector<16x1xf32>
    %41 = arith.addf %36, %40 : vector<16x1xf32>
    %c0_21 = arith.constant 0 : index
    %c0_22 = arith.constant 0 : index
    %42 = vector.load %arg14[%c0_21, %c0_22] : memref<16x1xf32, #tpu.memory_space<vmem>>, vector<16x1xf32>
    tpu.vector_store %arg14[%c0_21, %c0_22], %41 {strides = array<i32>} : memref<16x1xf32, #tpu.memory_space<vmem>>, vector<16x1xf32>,
    %c0_23 = arith.constant 0 : index
    %c0_24 = arith.constant 0 : index
    %43 = vector.load %arg13[%c0_23, %c0_24] : memref<16x1xf32, #tpu.memory_space<vmem>>, vector<16x1xf32>
    %c0_25 = arith.constant 0 : index
    %c0_26 = arith.constant 0 : index
    %44 = vector.load %arg11[%c0_25, %c0_26] : memref<16x1xf32, #tpu.memory_space<vmem>>, vector<16x1xf32>
    %45 = arith.subf %44, %21 : vector<16x1xf32>
    %46 = math.exp %45 : vector<16x1xf32>
    %47 = arith.mulf %43, %46 : vector<16x1xf32>
    %48 = vector.broadcast %7 : vector<1x128xf32> to vector<16x128xf32>
    %49 = arith.mulf %31, %48 : vector<16x128xf32>
    %cst_27 = arith.constant dense<0.000000e+00> : vector<16xf32>
    %50 = vector.multi_reduction <add>, %49, %cst_27 [1] : vector<16x128xf32> to vector<16xf32>
    %51 = vector.shape_cast %50 : vector<16xf32> to vector<16x1xf32>
    %52 = arith.addf %47, %51 : vector<16x1xf32>
    %c0_28 = arith.constant 0 : index
    %c0_29 = arith.constant 0 : index
    %53 = vector.load %arg13[%c0_28, %c0_29] : memref<16x1xf32, #tpu.memory_space<vmem>>, vector<16x1xf32>
    tpu.vector_store %arg13[%c0_28, %c0_29], %52 {strides = array<i32>} : memref<16x1xf32, #tpu.memory_space<vmem>>, vector<16x1xf32>,
    %c0_30 = arith.constant 0 : index
    %c0_31 = arith.constant 0 : index
    %54 = vector.load %arg12[%c0_30, %c0_31] : memref<16x1xf32, #tpu.memory_space<vmem>>, vector<16x1xf32>
    tpu.vector_store %arg12[%c0_30, %c0_31], %15 {strides = array<i32>} : memref<16x1xf32, #tpu.memory_space<vmem>>, vector<16x1xf32>,
    %c0_32 = arith.constant 0 : index
    %c0_33 = arith.constant 0 : index
    %55 = vector.load %arg11[%c0_32, %c0_33] : memref<16x1xf32, #tpu.memory_space<vmem>>, vector<16x1xf32>
    tpu.vector_store %arg11[%c0_32, %c0_33], %21 {strides = array<i32>} : memref<16x1xf32, #tpu.memory_space<vmem>>, vector<16x1xf32>,
    %c0_i32_34 = arith.constant 0 : i32
    %56 = arith.cmpi eq, %arg1, %c0_i32_34 : i32
    %57 = arith.extui %56 : i1 to i32
    %c0_i32_35 = arith.constant 0 : i32
    %58 = arith.cmpi ne, %57, %c0_i32_35 : i32
    scf.if %58 {
      %c0_36 = arith.constant 0 : index
      %c0_37 = arith.constant 0 : index
      %59 = vector.load %arg5[%c0_36, %c0_37] : memref<16x1xf32, #tpu.memory_space<vmem>>, vector<16x1xf32>
      %c0_38 = arith.constant 0 : index
      %c0_39 = arith.constant 0 : index
      %60 = vector.load %arg11[%c0_38, %c0_39] : memref<16x1xf32, #tpu.memory_space<vmem>>, vector<16x1xf32>
      %61 = arith.subf %59, %60 : vector<16x1xf32>
      %c0_40 = arith.constant 0 : index
      %c0_41 = arith.constant 0 : index
      %62 = vector.load %arg13[%c0_40, %c0_41] : memref<16x1xf32, #tpu.memory_space<vmem>>, vector<16x1xf32>
      %cst_42 = arith.constant 9.99999997E-7 : f32
      %63 = vector.broadcast %cst_42 : f32 to vector<16x1xf32>
      %64 = arith.addf %62, %63 : vector<16x1xf32>
      %65 = math.log %64 : vector<16x1xf32>
      %66 = arith.subf %61, %65 : vector<16x1xf32>
      %c0_43 = arith.constant 0 : index
      %c0_44 = arith.constant 0 : index
      %67 = vector.load %arg14[%c0_43, %c0_44] : memref<16x1xf32, #tpu.memory_space<vmem>>, vector<16x1xf32>
      %cst_45 = arith.constant 9.99999997E-7 : f32
      %68 = vector.broadcast %cst_45 : f32 to vector<16x1xf32>
      %69 = arith.addf %67, %68 : vector<16x1xf32>
      %70 = math.log %69 : vector<16x1xf32>
      %c0_46 = arith.constant 0 : index
      %c0_47 = arith.constant 0 : index
      %71 = vector.load %arg4[%c0_46, %c0_47] : memref<16x1xf32, #tpu.memory_space<vmem>>, vector<16x1xf32>
      %72 = arith.mulf %70, %71 : vector<16x1xf32>
      %c0_48 = arith.constant 0 : index
      %c0_49 = arith.constant 0 : index
      %73 = vector.load %arg3[%c0_48, %c0_49] : memref<16x1xf32, #tpu.memory_space<vmem>>, vector<16x1xf32>
      %74 = arith.mulf %73, %66 : vector<16x1xf32>
      %75 = arith.subf %72, %74 : vector<16x1xf32>
      %c0_50 = arith.constant 0 : index
      %c0_51 = arith.constant 0 : index
      %76 = vector.load %arg10[%c0_50, %c0_51] : memref<16x1xf32, #tpu.memory_space<vmem>>, vector<16x1xf32>
      tpu.vector_store %arg10[%c0_50, %c0_51], %75 {strides = array<i32>} : memref<16x1xf32, #tpu.memory_space<vmem>>, vector<16x1xf32>,
    } else {
    }
    return
  }
  func.func @transform_0(%arg0: i32, %arg1: i32) -> (i32, i32) {
    %c0_i32 = arith.constant 0 : i32
    %c0_i32_0 = arith.constant 0 : i32
    return %arg0, %c0_i32 : i32, i32
  }
  func.func @transform_1(%arg0: i32, %arg1: i32) -> (i32, i32) {
    %c0_i32 = arith.constant 0 : i32
    %c0_i32_0 = arith.constant 0 : i32
    return %arg0, %c0_i32 : i32, i32
  }
  func.func @transform_2(%arg0: i32, %arg1: i32) -> (i32, i32) {
    %c0_i32 = arith.constant 0 : i32
    %c0_i32_0 = arith.constant 0 : i32
    return %arg0, %c0_i32 : i32, i32
  }
  func.func @transform_3(%arg0: i32, %arg1: i32) -> (i32, i32) {
    %c0_i32 = arith.constant 0 : i32
    %c0_i32_0 = arith.constant 0 : i32
    return %arg0, %c0_i32 : i32, i32
  }
  func.func @transform_4(%arg0: i32, %arg1: i32) -> (i32, i32) {
    %c0_i32 = arith.constant 0 : i32
    %c0_i32_0 = arith.constant 0 : i32
    %c0_i32_1 = arith.constant 0 : i32
    return %c0_i32, %c0_i32_0 : i32, i32
  }
  func.func @transform_5(%arg0: i32, %arg1: i32) -> (i32, i32) {
    %c0_i32 = arith.constant 0 : i32
    %c0_i32_0 = arith.constant 0 : i32
    %c0_i32_1 = arith.constant 0 : i32
    return %c0_i32, %c0_i32_0 : i32, i32
  }
  func.func @transform_6(%arg0: i32, %arg1: i32) -> (i32, i32) {
    %c0_i32 = arith.constant 0 : i32
    %c0_i32_0 = arith.constant 0 : i32
    return %c0_i32, %arg1 : i32, i32
  }
  func.func @transform_7(%arg0: i32, %arg1: i32) -> (i32, i32) {
    %c0_i32 = arith.constant 0 : i32
    %c0_i32_0 = arith.constant 0 : i32
    return %c0_i32, %arg1 : i32, i32
  }
  func.func @transform_8(%arg0: i32, %arg1: i32) -> (i32, i32) {
    %c0_i32 = arith.constant 0 : i32
    %c0_i32_0 = arith.constant 0 : i32
    return %arg0, %c0_i32 : i32, i32
  }
}

</mosaic_0001>

<llo_original>
// kernel: tpu_custom_call.1
$region0: #{tpu_custom_call.1}
  #allocation0 [shape = 'u32[]', space=smem, size = 0x4, offset = 0x4, fixed_abs, tag = 'smem constant byte address 0x4 - core index']
  #allocation1 [shape = 'u32[144,128]{1,0:T(1,128)}', space=vmem, size = 0x12000, scoped, tag = 'internal scratch']
  #allocation2 [shape = 'f32[16,1]{1,0:T(8,128)}', space=vmem, size = 0x2000, scoped, tag = 'scratch operand']
  #allocation3 [shape = 'f32[16,1]{1,0:T(8,128)}', space=vmem, size = 0x2000, scoped, tag = 'scratch operand']
  #allocation4 [shape = 'f32[16,1]{1,0:T(8,128)}', space=vmem, size = 0x2000, scoped, tag = 'scratch operand']
  #allocation5 [shape = 'f32[16,1]{1,0:T(8,128)}', space=vmem, size = 0x2000, scoped, tag = 'scratch operand']
  %s0 = inlined_call_operand.vmem [shape: bf16[16,32], index: 0, kind: input, shape index: {}]
  %s1 = inlined_call_operand.vmem [shape: f32[16,1], index: 1, kind: input, shape index: {}]
  %s2 = inlined_call_operand.vmem [shape: f32[16,1], index: 2, kind: input, shape index: {}]
  %s3 = inlined_call_operand.vmem [shape: f32[16,1], index: 3, kind: input, shape index: {}]
  %s4 = inlined_call_operand.vmem [shape: bf16[32,128], index: 4, kind: input, shape index: {}]
  %s5 = inlined_call_operand.vmem [shape: f32[4,128], index: 5, kind: input, shape index: {}]
  %s6 = inlined_call_operand.vmem [shape: bf16[32,128], index: 6, kind: input, shape index: {}]
  %s7 = inlined_call_operand.vmem [shape: f32[4,128], index: 7, kind: input, shape index: {}]
  %s8 = inlined_call_operand.vmem [shape: f32[16,1], index: 8, kind: output, shape index: {}]
  %s9 = sld [smem:[#allocation0]]
  $region50: #{tpu_custom_call.1} parent=0
    _
  %s11 = ssub.s32 1, %s9
  %s12 = scalar_select 0, %s11, %s9
  // Predicated region
  $region2: #{tpu_custom_call.1} parent=0 // pred_check
    _
  $region3: #{tpu_custom_call.1} parent=0 // pred_check_branch
    %14 = sbr.rel (0) target = $region5
  $region4: #{tpu_custom_call.1} parent=0 // pred_region
    _
  $region5: #{tpu_custom_call.1} parent=0 // pred_fallthru
    _
  // Predicated region
  $region6: #{tpu_custom_call.1} parent=0 // pred_check
    _
  $region7: #{tpu_custom_call.1} parent=0 // pred_check_branch
    %16 = sbr.rel (0) target = $region9
  $region8: #{tpu_custom_call.1} parent=0 // pred_region
    _
  $region9: #{tpu_custom_call.1} parent=0 // pred_fallthru
    _
  // Predicated region
  $region10: #{tpu_custom_call.1} parent=0 // pred_check
    _
  $region11: #{tpu_custom_call.1} parent=0 // pred_check_branch
    %18 = sbr.rel (0) target = $region13
  $region12: #{tpu_custom_call.1} parent=0 // pred_region
    _
  $region13: #{tpu_custom_call.1} parent=0 // pred_fallthru
    _
  // Predicated region
  $region14: #{tpu_custom_call.1} parent=0 // pred_check
    _
  $region15: #{tpu_custom_call.1} parent=0 // pred_check_branch
    %20 = sbr.rel (0) target = $region17
  $region16: #{tpu_custom_call.1} parent=0 // pred_region
    _
  $region17: #{tpu_custom_call.1} parent=0 // pred_fallthru
    _
  // Predicated region
  $region18: #{tpu_custom_call.1} parent=0 // pred_check
    _
  $region19: #{tpu_custom_call.1} parent=0 // pred_check_branch
    %22 = sbr.rel (0) target = $region21
  $region20: #{tpu_custom_call.1} parent=0 // pred_region
    _
  $region21: #{tpu_custom_call.1} parent=0 // pred_fallthru
    _
  // Predicated region
  $region22: #{tpu_custom_call.1} parent=0 // pred_check
    _
  $region23: #{tpu_custom_call.1} parent=0 // pred_check_branch
    %24 = sbr.rel (0) target = $region25
  $region24: #{tpu_custom_call.1} parent=0 // pred_region
    _
  $region25: #{tpu_custom_call.1} parent=0 // pred_fallthru
    _
  // Predicated region
  $region26: #{tpu_custom_call.1} parent=0 // pred_check
    _
  $region27: #{tpu_custom_call.1} parent=0 // pred_check_branch
    %26 = sbr.rel (0) target = $region29
  $region28: #{tpu_custom_call.1} parent=0 // pred_region
    _
  $region29: #{tpu_custom_call.1} parent=0 // pred_fallthru
    _
  // Predicated region
  $region30: #{tpu_custom_call.1} parent=0 // pred_check
    _
  $region31: #{tpu_custom_call.1} parent=0 // pred_check_branch
    %28 = sbr.rel (0) target = $region33
  $region32: #{tpu_custom_call.1} parent=0 // pred_region
    _
  $region33: #{tpu_custom_call.1} parent=0 // pred_fallthru
    _
  %v30 = vld [vmem:[%s0] sm:$0xf]
  %v31 = vld [vmem:[%s0 + $0x4] sm:$0xf]
  %p32 = scmp.eq.s32.totalorder 0, 0
  // Predicated region
  $region34: #{tpu_custom_call.1} parent=0 // pred_check
    %p33 = pneg %p32
  $region35: #{tpu_custom_call.1} parent=0 // pred_check_branch
    %35 = sbr.rel (%p33) target = $region37
  $region36: #{tpu_custom_call.1} parent=0 // pred_region
    %vm36 = vcmask 7168
    %37 = vst.msk [vmem:[#allocation2] sm:$0xff] %vm36, -1e+30
    %38 = vst.msk [vmem:[#allocation2 + $0x8] sm:$0xff] %vm36, -1e+30
    %39 = vst.msk [vmem:[#allocation3] sm:$0xff] %vm36, -1e+30
    %40 = vst.msk [vmem:[#allocation3 + $0x8] sm:$0xff] %vm36, -1e+30
    %41 = vst.msk [vmem:[#allocation4] sm:$0xff] %vm36, 0.0
    %42 = vst.msk [vmem:[#allocation4 + $0x8] sm:$0xff] %vm36, 0.0
    %43 = vst.msk [vmem:[#allocation5] sm:$0xff] %vm36, 0.0
    %44 = vst.msk [vmem:[#allocation5 + $0x8] sm:$0xff] %vm36, 0.0
    %v45 = vld [vmem:[%s5] sm:$0x1]
    %v46 = vld [vmem:[%s5 + $0x1] sm:$0x1]
    %v47 = vld [vmem:[%s5 + $0x2] sm:$0x1]
    %v48 = vld [vmem:[%s5 + $0x3] sm:$0x1]
    %v49 = vld [vmem:[%s4] sm:$0xf]
    %v50 = vld [vmem:[%s4 + $0x4] sm:$0xf]
    %v51 = vld [vmem:[%s4 + $0x8] sm:$0xf]
    %v52 = vld [vmem:[%s4 + $0xc] sm:$0xf]
    %v55 = vunpack.c.l.b16 %v30
    %v56 = vunpack.c.l.b16 %v31
    %v57 = vpack.c.b16 %v56, %v55
    %v62 = vunpack.c.l.b16 %v49
    %v63 = vunpack.c.l.b16 %v50
    %v64 = vunpack.c.l.b16 %v51
    %v65 = vunpack.c.l.b16 %v52
    %v66 = vpack.c.b16 %v63, %v62
    %v67 = vpack.c.b16 %v65, %v64
    %vm70 = vcmask 261120
    %v72 = vsel %vm70, %v57, 0
    %74 = vmatprep.subr.bf16.mxu0 0
    %75 = vmatpush1.bf16.msra.mxu0 %v66
    %76 = vmatprep.subr.bf16.mxu0 0
    %77 = vmatpush1.bf16.msra.mxu0 %v67
    %78 = vmatprep.subr.bf16.mxu0 0
    %79 = vmatpush1.bf16.msra.mxu0 0
    %80 = vmatprep.subr.bf16.mxu0 0
    %81 = vmatpush1.bf16.msra.mxu0 0
    %82 = vmatprep.subr.bf16.mxu0 0
    %83 = vmatpush1.bf16.msra.mxu0 0
    %84 = vmatprep.subr.bf16.mxu0 0
    %85 = vmatpush1.bf16.msra.mxu0 0
    %86 = vmatprep.subr.bf16.mxu0 0
    %87 = vmatpush1.bf16.msra.mxu0 0
    %88 = vmatprep.subr.bf16.mxu0 0
    %89 = vmatpush1.bf16.msra.mxu0 0
    %90 = vmatprep.subr.bf16.mxu0 0
    %91 = vmatpush1.bf16.msra.mxu0 0
    %92 = vmatprep.subr.bf16.mxu0 0
    %93 = vmatpush1.bf16.msra.mxu0 0
    %94 = vmatprep.subr.bf16.mxu0 0
    %95 = vmatpush1.bf16.msra.mxu0 0
    %96 = vmatprep.subr.bf16.mxu0 0
    %97 = vmatpush1.bf16.msra.mxu0 0
    %98 = vmatprep.subr.bf16.mxu0 0
    %99 = vmatpush1.bf16.msra.mxu0 0
    %100 = vmatprep.subr.bf16.mxu0 0
    %101 = vmatpush1.bf16.msra.mxu0 0
    %102 = vmatprep.subr.bf16.mxu0 0
    %103 = vmatpush1.bf16.msra.mxu0 0
    %104 = vmatprep.subr.bf16.mxu0 0
    %105 = vmatpush1.bf16.msra.mxu0 0
    %106 = vmatprep.mubr.bf16.mxu0 0
    %107 = vmatmul.mubr.bf16.gmra.mrb[0].mxu0 %v72
    %v108 = vpop.f32.mrb[0].mxu0
    %v109 = vadd.f32 0.0, %v108
    %v110 = vpop.f32.mrb[0].mxu0
    %v111 = vpop.f32.mrb[0].mxu0
    %v112 = vadd.f32 0.0, %v111
    %v113 = vpop.f32.mrb[0].mxu0
    %114 = vdwg.mxu0
    %v115 = vld [vmem:[#allocation3] sm:$0xff]
    %v116 = vld [vmem:[#allocation3 + $0x8] sm:$0xff]
    %v117 = vlaneseq
    %v118 = vshrl.u32 %v117, 7
    %v119 = vsub.s32 0, %v118
    %v120 = vrot.slane %v45, %v119
    %v121 = vadd.f32 %v109, %v120
    %v122 = vadd.f32 %v112, %v120
    %123 = vmax.xlane.f32.xlu0 %v121
    %v124 = vpop.xlane.xlu0 %123
    %125 = vmax.xlane.f32.xlu0 %v122
    %v126 = vpop.xlane.xlu0 %125
    %v127 = vmax.f32 %v115, %v124
    %v128 = vmax.f32 %v116, %v126
    %v129 = vld [vmem:[#allocation2] sm:$0xff]
    %v130 = vld [vmem:[#allocation2 + $0x8] sm:$0xff]
    %v131 = vlaneseq
    %v132 = vshrl.u32 %v131, 7
    %v133 = vsub.s32 0, %v132
    %v134 = vrot.slane %v46, %v133
    %v135 = vadd.f32 %v109, %v134
    %v136 = vadd.f32 %v112, %v134
    %137 = vmax.xlane.f32.xlu0 %v135
    %v138 = vpop.xlane.xlu0 %137
    %139 = vmax.xlane.f32.xlu0 %v136
    %v140 = vpop.xlane.xlu0 %139
    %v141 = vmax.f32 %v129, %v138
    %v142 = vmax.f32 %v130, %v140
    %v143 = vsub.f32 %v127, %v141
    %v144 = vsub.f32 %v128, %v142
    %146 = vset.pattern.permute.xlu0 0
    %147 = vperm.xlu0 %146, %v141
    %v148 = vpop.permute.xlu0 %147
    %151 = vset.pattern.permute.xlu0 0
    %152 = vperm.xlu0 %151, %v142
    %v153 = vpop.permute.xlu0 %152
    %v155 = vsub.f32 %v109, %v148
    %v156 = vsub.f32 %v112, %v153
    %v157 = vlaneseq
    %v158 = vshrl.u32 %v157, 7
    %v159 = vsub.s32 0, %v158
    %v160 = vrot.slane %v47, %v159
    %162 = vset.pattern.permute.xlu0 0
    %163 = vperm.xlu0 %162, %v143
    %v164 = vpop.permute.xlu0 %163
    %167 = vset.pattern.permute.xlu0 0
    %168 = vperm.xlu0 %167, %v144
    %v169 = vpop.permute.xlu0 %168
    %v171 = vmul.f32 %v160, %v164
    %v172 = vmul.f32 %v160, %v169
    %v173 = vsub.f32 %v155, %v171
    %v174 = vsub.f32 %v156, %v172
    %v175 = vmin.f32 %v173, 0.0
    %v176 = vmin.f32 %v174, 0.0
    %v177 = vmul.f32 %v175, 1.442695
    %v178 = vpow.pop %v177
    %v179 = vmul.f32 %v176, 1.442695
    %v180 = vpow.pop %v179
    %v181 = vld [vmem:[#allocation5] sm:$0xff]
    %v182 = vld [vmem:[#allocation5 + $0x8] sm:$0xff]
    %v183 = vsub.f32 %v115, %v127
    %v184 = vsub.f32 %v116, %v128
    %v185 = vmul.f32 %v183, 1.442695
    %v186 = vpow.pop %v185
    %v187 = vmul.f32 %v184, 1.442695
    %v188 = vpow.pop %v187
    %v189 = vmul.f32 %v181, %v186
    %v190 = vmul.f32 %v182, %v188
    %v191 = vmul.f32 %v178, %v160
    %v192 = vmul.f32 %v180, %v160
    %193 = vadd.xlane.f32.xlu0 %v191
    %v194 = vpop.xlane.xlu0 %193
    %195 = vadd.xlane.f32.xlu0 %v192
    %v196 = vpop.xlane.xlu0 %195
    %v197 = vadd.f32 %v189, %v194
    %v198 = vadd.f32 %v190, %v196
    %199 = vst.msk [vmem:[#allocation5] sm:$0xff] %vm36, %v197
    %200 = vst.msk [vmem:[#allocation5 + $0x8] sm:$0xff] %vm36, %v198
    %v201 = vld [vmem:[#allocation4] sm:$0xff]
    %v202 = vld [vmem:[#allocation4 + $0x8] sm:$0xff]
    %v203 = vld [vmem:[#allocation2] sm:$0xff]
    %v204 = vld [vmem:[#allocation2 + $0x8] sm:$0xff]
    %v205 = vsub.f32 %v203, %v141
    %v206 = vsub.f32 %v204, %v142
    %v207 = vmul.f32 %v205, 1.442695
    %v208 = vpow.pop %v207
    %v209 = vmul.f32 %v206, 1.442695
    %v210 = vpow.pop %v209
    %v211 = vmul.f32 %v201, %v208
    %v212 = vmul.f32 %v202, %v210
    %v213 = vlaneseq
    %v214 = vshrl.u32 %v213, 7
    %v215 = vsub.s32 0, %v214
    %v216 = vrot.slane %v48, %v215
    %v217 = vmul.f32 %v178, %v216
    %v218 = vmul.f32 %v180, %v216
    %219 = vadd.xlane.f32.xlu0 %v217
    %v220 = vpop.xlane.xlu0 %219
    %221 = vadd.xlane.f32.xlu0 %v218
    %v222 = vpop.xlane.xlu0 %221
    %v223 = vadd.f32 %v211, %v220
    %v224 = vadd.f32 %v212, %v222
    %225 = vst.msk [vmem:[#allocation4] sm:$0xff] %vm36, %v223
    %226 = vst.msk [vmem:[#allocation4 + $0x8] sm:$0xff] %vm36, %v224
    %227 = vst.msk [vmem:[#allocation3] sm:$0xff] %vm36, %v127
    %228 = vst.msk [vmem:[#allocation3 + $0x8] sm:$0xff] %vm36, %v128
    %229 = vst.msk [vmem:[#allocation2] sm:$0xff] %vm36, %v141
    %230 = vst.msk [vmem:[#allocation2 + $0x8] sm:$0xff] %vm36, %v142
  $region37: #{tpu_custom_call.1} parent=0 // pred_fallthru
    _
  %v231 = vld [vmem:[%s7] sm:$0x1]
  %v232 = vld [vmem:[%s7 + $0x1] sm:$0x1]
  %v233 = vld [vmem:[%s7 + $0x2] sm:$0x1]
  %v234 = vld [vmem:[%s7 + $0x3] sm:$0x1]
  %v235 = vld [vmem:[%s6] sm:$0xf]
  %v236 = vld [vmem:[%s6 + $0x4] sm:$0xf]
  %v237 = vld [vmem:[%s6 + $0x8] sm:$0xf]
  %v238 = vld [vmem:[%s6 + $0xc] sm:$0xf]
  %v241 = vunpack.c.l.b16 %v30
  %v242 = vunpack.c.l.b16 %v31
  %v243 = vpack.c.b16 %v242, %v241
  %v248 = vunpack.c.l.b16 %v235
  %v249 = vunpack.c.l.b16 %v236
  %v250 = vunpack.c.l.b16 %v237
  %v251 = vunpack.c.l.b16 %v238
  %v252 = vpack.c.b16 %v249, %v248
  %v253 = vpack.c.b16 %v251, %v250
  %vm256 = vcmask 261120
  %v258 = vsel %vm256, %v243, 0
  %260 = vmatprep.subr.bf16.mxu0 0
  %261 = vmatpush1.bf16.msra.mxu0 %v252
  %262 = vmatprep.subr.bf16.mxu0 0
  %263 = vmatpush1.bf16.msra.mxu0 %v253
  %264 = vmatprep.subr.bf16.mxu0 0
  %265 = vmatpush1.bf16.msra.mxu0 0
  %266 = vmatprep.subr.bf16.mxu0 0
  %267 = vmatpush1.bf16.msra.mxu0 0
  %268 = vmatprep.subr.bf16.mxu0 0
  %269 = vmatpush1.bf16.msra.mxu0 0
  %270 = vmatprep.subr.bf16.mxu0 0
  %271 = vmatpush1.bf16.msra.mxu0 0
  %272 = vmatprep.subr.bf16.mxu0 0
  %273 = vmatpush1.bf16.msra.mxu0 0
  %274 = vmatprep.subr.bf16.mxu0 0
  %275 = vmatpush1.bf16.msra.mxu0 0
  %276 = vmatprep.subr.bf16.mxu0 0
  %277 = vmatpush1.bf16.msra.mxu0 0
  %278 = vmatprep.subr.bf16.mxu0 0
  %279 = vmatpush1.bf16.msra.mxu0 0
  %280 = vmatprep.subr.bf16.mxu0 0
  %281 = vmatpush1.bf16.msra.mxu0 0
  %282 = vmatprep.subr.bf16.mxu0 0
  %283 = vmatpush1.bf16.msra.mxu0 0
  %284 = vmatprep.subr.bf16.mxu0 0
  %285 = vmatpush1.bf16.msra.mxu0 0
  %286 = vmatprep.subr.bf16.mxu0 0
  %287 = vmatpush1.bf16.msra.mxu0 0
  %288 = vmatprep.subr.bf16.mxu0 0
  %289 = vmatpush1.bf16.msra.mxu0 0
  %290 = vmatprep.subr.bf16.mxu0 0
  %291 = vmatpush1.bf16.msra.mxu0 0
  %292 = vmatprep.mubr.bf16.mxu0 0
  %293 = vmatmul.mubr.bf16.gmra.mrb[0].mxu0 %v258
  %v294 = vpop.f32.mrb[0].mxu0
  %v295 = vadd.f32 0.0, %v294
  %v296 = vpop.f32.mrb[0].mxu0
  %v297 = vpop.f32.mrb[0].mxu0
  %v298 = vadd.f32 0.0, %v297
  %v299 = vpop.f32.mrb[0].mxu0
  %300 = vdwg.mxu0
  %v301 = vld [vmem:[#allocation3] sm:$0xff]
  %v302 = vld [vmem:[#allocation3 + $0x8] sm:$0xff]
  %v303 = vlaneseq
  %v304 = vshrl.u32 %v303, 7
  %v305 = vsub.s32 0, %v304
  %v306 = vrot.slane %v231, %v305
  %v307 = vadd.f32 %v295, %v306
  %v308 = vadd.f32 %v298, %v306
  %309 = vmax.xlane.f32.xlu0 %v307
  %v310 = vpop.xlane.xlu0 %309
  %311 = vmax.xlane.f32.xlu0 %v308
  %v312 = vpop.xlane.xlu0 %311
  %v313 = vmax.f32 %v301, %v310
  %v314 = vmax.f32 %v302, %v312
  %v315 = vld [vmem:[#allocation2] sm:$0xff]
  %v316 = vld [vmem:[#allocation2 + $0x8] sm:$0xff]
  %v317 = vlaneseq
  %v318 = vshrl.u32 %v317, 7
  %v319 = vsub.s32 0, %v318
  %v320 = vrot.slane %v232, %v319
  %v321 = vadd.f32 %v295, %v320
  %v322 = vadd.f32 %v298, %v320
  %323 = vmax.xlane.f32.xlu0 %v321
  %v324 = vpop.xlane.xlu0 %323
  %325 = vmax.xlane.f32.xlu0 %v322
  %v326 = vpop.xlane.xlu0 %325
  %v327 = vmax.f32 %v315, %v324
  %v328 = vmax.f32 %v316, %v326
  %v329 = vsub.f32 %v313, %v327
  %v330 = vsub.f32 %v314, %v328
  %332 = vset.pattern.permute.xlu0 0
  %333 = vperm.xlu0 %332, %v327
  %v334 = vpop.permute.xlu0 %333
  %337 = vset.pattern.permute.xlu0 0
  %338 = vperm.xlu0 %337, %v328
  %v339 = vpop.permute.xlu0 %338
  %v341 = vsub.f32 %v295, %v334
  %v342 = vsub.f32 %v298, %v339
  %v343 = vlaneseq
  %v344 = vshrl.u32 %v343, 7
  %v345 = vsub.s32 0, %v344
  %v346 = vrot.slane %v233, %v345
  %348 = vset.pattern.permute.xlu0 0
  %349 = vperm.xlu0 %348, %v329
  %v350 = vpop.permute.xlu0 %349
  %353 = vset.pattern.permute.xlu0 0
  %354 = vperm.xlu0 %353, %v330
  %v355 = vpop.permute.xlu0 %354
  %v357 = vmul.f32 %v346, %v350
  %v358 = vmul.f32 %v346, %v355
  %v359 = vsub.f32 %v341, %v357
  %v360 = vsub.f32 %v342, %v358
  %v361 = vmin.f32 %v359, 0.0
  %v362 = vmin.f32 %v360, 0.0
  %v363 = vmul.f32 %v361, 1.442695
  %v364 = vpow.pop %v363
  %v365 = vmul.f32 %v362, 1.442695
  %v366 = vpow.pop %v365
  %v367 = vld [vmem:[#allocation5] sm:$0xff]
  %v368 = vld [vmem:[#allocation5 + $0x8] sm:$0xff]
  %v369 = vsub.f32 %v301, %v313
  %v370 = vsub.f32 %v302, %v314
  %v371 = vmul.f32 %v369, 1.442695
  %v372 = vpow.pop %v371
  %v373 = vmul.f32 %v370, 1.442695
  %v374 = vpow.pop %v373
  %v375 = vmul.f32 %v367, %v372
  %v376 = vmul.f32 %v368, %v374
  %v377 = vmul.f32 %v364, %v346
  %v378 = vmul.f32 %v366, %v346
  %379 = vadd.xlane.f32.xlu0 %v377
  %v380 = vpop.xlane.xlu0 %379
  %381 = vadd.xlane.f32.xlu0 %v378
  %v382 = vpop.xlane.xlu0 %381
  %v383 = vadd.f32 %v375, %v380
  %v384 = vadd.f32 %v376, %v382
  %vm385 = vcmask 7168
  %386 = vst.msk [vmem:[#allocation5] sm:$0xff] %vm385, %v383
  %387 = vst.msk [vmem:[#allocation5 + $0x8] sm:$0xff] %vm385, %v384
  %v388 = vld [vmem:[#allocation4] sm:$0xff]
  %v389 = vld [vmem:[#allocation4 + $0x8] sm:$0xff]
  %v390 = vld [vmem:[#allocation2] sm:$0xff]
  %v391 = vld [vmem:[#allocation2 + $0x8] sm:$0xff]
  %v392 = vsub.f32 %v390, %v327
  %v393 = vsub.f32 %v391, %v328
  %v394 = vmul.f32 %v392, 1.442695
  %v395 = vpow.pop %v394
  %v396 = vmul.f32 %v393, 1.442695
  %v397 = vpow.pop %v396
  %v398 = vmul.f32 %v388, %v395
  %v399 = vmul.f32 %v389, %v397
  %v400 = vlaneseq
  %v401 = vshrl.u32 %v400, 7
  %v402 = vsub.s32 0, %v401
  %v403 = vrot.slane %v234, %v402
  %v404 = vmul.f32 %v364, %v403
  %v405 = vmul.f32 %v366, %v403
  %406 = vadd.xlane.f32.xlu0 %v404
  %v407 = vpop.xlane.xlu0 %406
  %408 = vadd.xlane.f32.xlu0 %v405
  %v409 = vpop.xlane.xlu0 %408
  %v410 = vadd.f32 %v398, %v407
  %v411 = vadd.f32 %v399, %v409
  %412 = vst.msk [vmem:[#allocation4] sm:$0xff] %vm385, %v410
  %413 = vst.msk [vmem:[#allocation4 + $0x8] sm:$0xff] %vm385, %v411
  %414 = vst.msk [vmem:[#allocation3] sm:$0xff] %vm385, %v313
  %415 = vst.msk [vmem:[#allocation3 + $0x8] sm:$0xff] %vm385, %v314
  %416 = vst.msk [vmem:[#allocation2] sm:$0xff] %vm385, %v327
  %417 = vst.msk [vmem:[#allocation2 + $0x8] sm:$0xff] %vm385, %v328
  // Predicated region
  $region38: #{tpu_custom_call.1} parent=0 // pred_check
    %p418 = pneg %p32
  $region39: #{tpu_custom_call.1} parent=0 // pred_check_branch
    %420 = sbr.rel (%p418) target = $region41
  $region40: #{tpu_custom_call.1} parent=0 // pred_region
    %v421 = vld [vmem:[%s3] sm:$0xff]
    %v422 = vld [vmem:[%s3 + $0x8] sm:$0xff]
    %v423 = vld [vmem:[#allocation2] sm:$0xff]
    %v424 = vld [vmem:[#allocation2 + $0x8] sm:$0xff]
    %v425 = vsub.f32 %v421, %v423
    %v426 = vsub.f32 %v422, %v424
    %v427 = vld [vmem:[#allocation4] sm:$0xff]
    %v428 = vld [vmem:[#allocation4 + $0x8] sm:$0xff]
    %v429 = vadd.f32 %v427, 1e-06
    %v430 = vadd.f32 %v428, 1e-06
    %v431 = vlog2.pop %v429
    %v432 = vmul.f32 %v431, 0.6931472
    %v433 = vlog2.pop %v430
    %v434 = vmul.f32 %v433, 0.6931472
    %v435 = vsub.f32 %v425, %v432
    %v436 = vsub.f32 %v426, %v434
    %v437 = vld [vmem:[#allocation5] sm:$0xff]
    %v438 = vld [vmem:[#allocation5 + $0x8] sm:$0xff]
    %v439 = vadd.f32 %v437, 1e-06
    %v440 = vadd.f32 %v438, 1e-06
    %v441 = vlog2.pop %v439
    %v442 = vmul.f32 %v441, 0.6931472
    %v443 = vlog2.pop %v440
    %v444 = vmul.f32 %v443, 0.6931472
    %v445 = vld [vmem:[%s2] sm:$0xff]
    %v446 = vld [vmem:[%s2 + $0x8] sm:$0xff]
    %v447 = vmul.f32 %v442, %v445
    %v448 = vmul.f32 %v444, %v446
    %v449 = vld [vmem:[%s1] sm:$0xff]
    %v450 = vld [vmem:[%s1 + $0x8] sm:$0xff]
    %v451 = vmul.f32 %v449, %v435
    %v452 = vmul.f32 %v450, %v436
    %v453 = vsub.f32 %v447, %v451
    %v454 = vsub.f32 %v448, %v452
    %455 = vst.msk [vmem:[%s8] sm:$0xff] %vm385, %v453
    %456 = vst.msk [vmem:[%s8 + $0x8] sm:$0xff] %vm385, %v454
  $region41: #{tpu_custom_call.1} parent=0 // pred_fallthru
    _
  // Predicated region
  $region42: #{tpu_custom_call.1} parent=0 // pred_check
    _
  $region43: #{tpu_custom_call.1} parent=0 // pred_check_branch
    %458 = sbr.rel (0) target = $region45
  $region44: #{tpu_custom_call.1} parent=0 // pred_region
    _
  $region45: #{tpu_custom_call.1} parent=0 // pred_fallthru
    _
  // Predicated region
  $region46: #{tpu_custom_call.1} parent=0 // pred_check
    _
  $region47: #{tpu_custom_call.1} parent=0 // pred_check_branch
    %460 = sbr.rel (0) target = $region49
  $region48: #{tpu_custom_call.1} parent=0 // pred_region
    _
  $region49: #{tpu_custom_call.1} parent=0 // pred_fallthru
    _

</llo_original>
